<compile_context>
chip_gen: v5e
topology: v5e:2x2
jax: 0.10.0
libtpu: 0.0.40
codegen_flags: <defaults>
</compile_context>

<pallas_src>
import numpy as np

import jax
import jax.numpy as jnp
from jax.experimental import pallas as pl
from jax.experimental.pallas import tpu as pltpu


def _round_up(a, b):
    return (a + b - 1) // b * b


def _cdiv(a, b):
    return (a + b - 1) // b


def _forest_kernel(x_ref, wt_ref, b_ref, a_ref, pi_ref, out_ref):
    """One grid step == (row tile i, tree group g); accumulates over g."""
    g = pl.program_id(1)

    # Node logits for every node of every tree in this group (one matmul).
    logits = (jnp.dot(x_ref[...], wt_ref[...],
                      preferred_element_type=jnp.float32) + b_ref[...])

    # softplus(-z) = -log(sigmoid(z)) (stable); softplus(z) = z + softplus(-z).
    shared = jnp.log(1.0 + jnp.exp(-jnp.abs(logits)))
    sp_neg = jnp.maximum(-logits, 0.0) + shared
    sp_pos = logits + sp_neg

    # Single fused routing matmul: [sp_neg | sp_pos] @ [A_keep ; A_flip].
    sp = jnp.concatenate([sp_neg, sp_pos], axis=1).astype(a_ref.dtype)
    log_rt = -jnp.dot(sp, a_ref[...], preferred_element_type=jnp.float32)
    routing = jnp.exp(log_rt).astype(pi_ref.dtype)        # (tile_m, gleaf_pad)

    # Group prediction; tree-sum folded into K, pi already softmaxed / n_label.
    contrib = jnp.dot(routing, pi_ref[...], preferred_element_type=jnp.float32)

    @pl.when(g == 0)
    def _():
        out_ref[...] = contrib

    @pl.when(g != 0)
    def _():
        out_ref[...] = out_ref[...] + contrib


def _routing_matrices(depth):
    """Static (n_node, n_leaf) 0/1 matrices: A_keep picks `decision`, A_flip
    picks `1 - decision`, matching the PyTorch view/repeat/cat interleaving."""
    n_node = 2 ** depth - 1
    n_leaf = 2 ** depth
    a_keep = np.zeros((n_node, n_leaf), np.float32)
    a_flip = np.zeros((n_node, n_leaf), np.float32)
    for j in range(n_leaf):
        for l in range(depth):
            node = (1 << l) - 1 + (j >> (depth - l))
            bit = (j >> (depth - 1 - l)) & 1
            (a_flip if bit else a_keep)[node, j] = 1.0
    return a_keep, a_flip


def conditional_forest_forward(x, W, b, pi, *, depth, n_label, tile_m=None):
    """Pallas forward pass for Conditional_forest with conditional=False."""
    # TODO(synk): the `conditional=True` branches (token-sequential mixing and
    # dependence_length rounds) are inherently sequential scans not implemented here.
    B, T, D = x.shape
    n_trees, n_node, _ = W.shape
    n_leaf = 2 ** depth
    M = B * T

    compute_dtype = jnp.bfloat16 if x.dtype == jnp.bfloat16 else jnp.float32

    # ---- tree grouping (block-diagonal routing only within one group) -------
    G = max(1, min(n_trees, (128 // n_leaf) if n_leaf <= 128 else 1))
    num_groups = _cdiv(n_trees, G)
    n_trees_pad = num_groups * G
    gnode, gleaf = G * n_node, G * n_leaf
    gnode_pad = _round_up(gnode, 128)
    gleaf_pad = _round_up(gleaf, 128)
    label_pad = _round_up(n_label, 128)

    # ---- per-generation tiling / VMEM budget ---------------------------------
    try:
        kind = jax.devices()[0].device_kind.lower()
    except Exception:
        kind = ""
    if "v7" in kind:
        tile_default, vmem_cap = 256, 48 << 20          # 64 MiB physical VMEM
    elif "v5" in kind or "v6" in kind:
        tile_default, vmem_cap = 1024, 100 << 20        # 128 MiB physical VMEM
    else:
        tile_default, vmem_cap = 512, 64 << 20
    if tile_m is None:
        tile_m = tile_default
    tile_m = min(tile_m, _round_up(M, 16))
    if "v7" in kind and M >= 64:
        # >= 2 row tiles so the "parallel" axis shards over both TensorCores.
        tile_m = min(tile_m, max(16, _round_up(_cdiv(M, 2), 16)))
    tile_m = max(16, _round_up(tile_m, 16))

    isz = jnp.dtype(compute_dtype).itemsize

    def vmem_est(tm):
        params = 2 * (D * gnode_pad * isz + 2 * gnode_pad * gleaf_pad * isz
                      + gleaf_pad * label_pad * isz + 8 * gnode_pad * 4)
        act = 2 * tm * D * isz + 2 * tm * label_pad * 4
        tmp = tm * (4 * gnode_pad + 2 * gleaf_pad) * 4
        return params + act + tmp

    while tile_m > 64 and vmem_est(tile_m) > vmem_cap:
        tile_m = max(64, _round_up(tile_m // 2, 16))

    # ---- operands (no M / D padding of x: no extra HBM passes) ---------------
    x2 = x.reshape(M, D).astype(compute_dtype)

    pad_t = n_trees_pad - n_trees
    W_p = jnp.pad(W.astype(compute_dtype), ((0, pad_t), (0, 0), (0, 0)))
    W_grp = W_p.reshape(num_groups, gnode, D)
    W_grp = jnp.pad(W_grp, ((0, 0), (0, gnode_pad - gnode), (0, 0)))
    wt_all = jnp.transpose(W_grp, (2, 0, 1)).reshape(D, num_groups * gnode_pad)

    b_p = jnp.pad(b.astype(jnp.float32), ((0, pad_t), (0, 0)))
    b_grp = jnp.pad(b_p.reshape(num_groups, gnode), ((0, 0), (0, gnode_pad - gnode)))
    b_all = b_grp.reshape(1, num_groups * gnode_pad)

    # Static per-group routing incidence [A_keep ; A_flip]; identical for every
    # group -> stored once and kept resident (index map (0, 0) for all steps).
    a_keep, a_flip = _routing_matrices(depth)
    eye_g = np.eye(G, dtype=np.float32)
    a_cat = np.zeros((2 * gnode_pad, gleaf_pad), np.float32)
    a_cat[:gnode, :gleaf] = np.kron(eye_g, a_keep)
    a_cat[gnode_pad:gnode_pad + gnode, :gleaf] = np.kron(eye_g, a_flip)
    a_all = jnp.asarray(a_cat, dtype=compute_dtype)

    # softmax(pi) with the 1/n_label scale folded in; padded trees/leaves/labels
    # are zero rows/cols so they contribute nothing.
    pi_soft = jax.nn.softmax(pi.astype(jnp.float32), axis=2) / n_label
    pi_soft = jnp.pad(pi_soft, ((0, pad_t), (0, 0), (0, 0)))
    pi_grp = pi_soft.reshape(num_groups, gleaf, n_label)
    pi_grp = jnp.pad(pi_grp, ((0, 0), (0, gleaf_pad - gleaf),
                              (0, label_pad - n_label)))
    pi_all = pi_grp.reshape(num_groups * gleaf_pad, label_pad).astype(compute_dtype)

    grid = (_cdiv(M, tile_m), num_groups)

    out = pl.pallas_call(
        _forest_kernel,
        out_shape=jax.ShapeDtypeStruct((M, label_pad), jnp.float32),
        grid_spec=pltpu.PrefetchScalarGridSpec(
            num_scalar_prefetch=0,
            grid=grid,
            in_specs=[
                pl.BlockSpec((tile_m, D), lambda i, g: (i, 0)),           # x rows
                pl.BlockSpec((D, gnode_pad), lambda i, g: (0, g)),        # W^T (group g)
                pl.BlockSpec((1, gnode_pad), lambda i, g: (0, g)),        # bias  (group g)
                pl.BlockSpec((2 * gnode_pad, gleaf_pad),
                             lambda i, g: (0, 0)),                        # [A_keep;A_flip]
                pl.BlockSpec((gleaf_pad, label_pad), lambda i, g: (g, 0)),  # softmax(pi)/n_label
            ],
            out_specs=pl.BlockSpec((tile_m, label_pad), lambda i, g: (i, 0)),
        ),
        compiler_params=pltpu.CompilerParams(
            dimension_semantics=("parallel", "arbitrary"),
            vmem_limit_bytes=int(vmem_cap),
        ),
    )(x2, wt_all, b_all, a_all, pi_all)

    return out[:, :n_label].reshape(B, T, n_label)


def _reference(x, W, b, pi, depth, n_label):
    """Plain-JAX transcription of the PyTorch forward (conditional=False)."""
    B, T, _ = x.shape
    n_trees = W.shape[0]
    pred = jnp.zeros((B, T, n_label), jnp.float32)
    for i in range(n_trees):
        d = jax.nn.sigmoid(jnp.einsum("btd,nd->btn", x, W[i]) + b[i])
        dc = jnp.stack([d, 1.0 - d], axis=-1)           # (B, T, n_node, 2)
        routing = jnp.ones((B, T, 1, 1), jnp.float32)
        begin, end = 0, 1
        for _ in range(depth):
            routing = jnp.repeat(routing.reshape(B, T, -1, 1), 2, axis=3)
            routing = routing * dc[:, :, begin:end, :]
            begin, end = end, 2 * end + 1
        routing = routing.reshape(B, T, 2 ** depth)
        pred = pred + routing @ jax.nn.softmax(pi[i], axis=1) * (1.0 / n_label)
    return pred


if __name__ == "__main__":
    # Small, deterministic config consistent with the module.
    B, T, D = 2, 8, 32          # batch, n_tokens, input_d
    n_trees, depth, n_label = 4, 3, 4
    n_node = 2 ** depth - 1
    n_leaf = 2 ** depth

    key = jax.random.PRNGKey(0)
    kx, kw, kb, kp = jax.random.split(key, 4)
    x = jax.random.normal(kx, (B, T, D), dtype=jnp.float32)
    # Deterministic synthetic parameters (shapes from tree.__init__).
    W = jax.random.uniform(kw, (n_trees, n_node, D), dtype=jnp.float32,
                           minval=-0.2, maxval=0.2)
    b = jax.random.uniform(kb, (n_trees, n_node), dtype=jnp.float32,
                           minval=-0.2, maxval=0.2)
    pi = jax.random.uniform(kp, (n_trees, n_leaf, n_label), dtype=jnp.float32)

    out = conditional_forest_forward(x, W, b, pi, depth=depth, n_label=n_label)
    out = jax.block_until_ready(out)

    ref = _reference(x, W, b, pi, depth, n_label)
    assert out.shape == (B, T, n_label)
    assert jnp.allclose(out, ref, atol=2e-5, rtol=2e-5), (
        f"max err {jnp.max(jnp.abs(out - ref))}")
    print("KERNEL_OK")
</pallas_src>

<mosaic_0001>
module attributes {stable_mosaic.version = 11 : i64} {
  func.func @_forest_kernel(%arg0: i32, %arg1: i32, %arg2: memref<16x32xf32, #tpu.memory_space<vmem>>, %arg3: memref<32x128xf32, #tpu.memory_space<vmem>>, %arg4: memref<1x128xf32, #tpu.memory_space<vmem>>, %arg5: memref<256x128xf32, #tpu.memory_space<vmem>>, %arg6: memref<128x128xf32, #tpu.memory_space<vmem>>, %arg7: memref<16x128xf32, #tpu.memory_space<vmem>>) attributes {dimension_semantics = [#tpu.dimension_semantics<parallel>, #tpu.dimension_semantics<arbitrary>], iteration_bounds = array<i64: 1, 1>, scalar_prefetch = 0 : i64, scratch_operands = 0 : i64, tpu.core_type = #tpu.core_type<tc>, window_params = [{transform_indices = @transform_0, window_bounds = array<i64: 16, 32>}, {transform_indices = @transform_1, window_bounds = array<i64: 32, 128>}, {transform_indices = @transform_2, window_bounds = array<i64: 1, 128>}, {pipeline_mode = #tpu.pipeline_mode<synchronous>, transform_indices = @transform_3, window_bounds = array<i64: 256, 128>}, {transform_indices = @transform_4, window_bounds = array<i64: 128, 128>}, {transform_indices = @transform_5, window_bounds = array<i64: 16, 128>}]} {
    %c0 = arith.constant 0 : index
    %c0_0 = arith.constant 0 : index
    %0 = vector.load %arg2[%c0, %c0_0] : memref<16x32xf32, #tpu.memory_space<vmem>>, vector<16x32xf32>
    %c0_1 = arith.constant 0 : index
    %c0_2 = arith.constant 0 : index
    %1 = vector.load %arg3[%c0_1, %c0_2] : memref<32x128xf32, #tpu.memory_space<vmem>>, vector<32x128xf32>
    %cst = arith.constant dense<0.000000e+00> : vector<16x128xf32>
    %2 = tpu.matmul %0, %1, %cst {dimension_numbers = #tpu.dot_dimension_numbers<[1], [0], [0], [1], [0, 0, 1, 1], [], []>} : vector<16x32xf32>, vector<32x128xf32>, vector<16x128xf32> -> vector<16x128xf32>
    %c0_3 = arith.constant 0 : index
    %c0_4 = arith.constant 0 : index
    %3 = vector.load %arg4[%c0_3, %c0_4] : memref<1x128xf32, #tpu.memory_space<vmem>>, vector<1x128xf32>
    %4 = vector.broadcast %3 : vector<1x128xf32> to vector<16x128xf32>
    %5 = arith.addf %2, %4 : vector<16x128xf32>
    %6 = math.absf %5 : vector<16x128xf32>
    %cst_5 = arith.constant 0.000000e+00 : f32
    %7 = vector.broadcast %cst_5 : f32 to vector<16x128xf32>
    %8 = arith.subf %7, %6 : vector<16x128xf32>
    %9 = math.exp %8 : vector<16x128xf32>
    %cst_6 = arith.constant 1.000000e+00 : f32
    %10 = vector.broadcast %cst_6 : f32 to vector<16x128xf32>
    %11 = arith.addf %10, %9 : vector<16x128xf32>
    %12 = math.log %11 : vector<16x128xf32>
    %cst_7 = arith.constant 0.000000e+00 : f32
    %13 = vector.broadcast %cst_7 : f32 to vector<16x128xf32>
    %14 = arith.subf %13, %5 : vector<16x128xf32>
    %cst_8 = arith.constant 0.000000e+00 : f32
    %15 = vector.broadcast %cst_8 : f32 to vector<16x128xf32>
    %16 = arith.maximumf %14, %15 : vector<16x128xf32>
    %17 = arith.addf %16, %12 : vector<16x128xf32>
    %18 = arith.addf %5, %17 : vector<16x128xf32>
    %19 = tpu.concatenate %17, %18 in 1 : vector<16x128xf32>, vector<16x128xf32> -> vector<16x256xf32>
    %c0_9 = arith.constant 0 : index
    %c0_10 = arith.constant 0 : index
    %20 = vector.load %arg5[%c0_9, %c0_10] : memref<256x128xf32, #tpu.memory_space<vmem>>, vector<256x128xf32>
    %cst_11 = arith.constant dense<0.000000e+00> : vector<16x128xf32>
    %21 = tpu.matmul %19, %20, %cst_11 {dimension_numbers = #tpu.dot_dimension_numbers<[1], [0], [0], [1], [0, 0, 1, 1], [], []>} : vector<16x256xf32>, vector<256x128xf32>, vector<16x128xf32> -> vector<16x128xf32>
    %cst_12 = arith.constant 0.000000e+00 : f32
    %22 = vector.broadcast %cst_12 : f32 to vector<16x128xf32>
    %23 = arith.subf %22, %21 : vector<16x128xf32>
    %24 = math.exp %23 : vector<16x128xf32>
    %c0_13 = arith.constant 0 : index
    %c0_14 = arith.constant 0 : index
    %25 = vector.load %arg6[%c0_13, %c0_14] : memref<128x128xf32, #tpu.memory_space<vmem>>, vector<128x128xf32>
    %cst_15 = arith.constant dense<0.000000e+00> : vector<16x128xf32>
    %26 = tpu.matmul %24, %25, %cst_15 {dimension_numbers = #tpu.dot_dimension_numbers<[1], [0], [0], [1], [0, 0, 1, 1], [], []>} : vector<16x128xf32>, vector<128x128xf32>, vector<16x128xf32> -> vector<16x128xf32>
    %c0_i32 = arith.constant 0 : i32
    %27 = arith.cmpi eq, %arg1, %c0_i32 : i32
    %28 = arith.extui %27 : i1 to i32
    %c0_i32_16 = arith.constant 0 : i32
    %29 = arith.cmpi ne, %28, %c0_i32_16 : i32
    scf.if %29 {
      %c0_19 = arith.constant 0 : index
      %c0_20 = arith.constant 0 : index
      %33 = vector.load %arg7[%c0_19, %c0_20] : memref<16x128xf32, #tpu.memory_space<vmem>>, vector<16x128xf32>
      tpu.vector_store %arg7[%c0_19, %c0_20], %26 {strides = array<i32>} : memref<16x128xf32, #tpu.memory_space<vmem>>, vector<16x128xf32>,
    } else {
    }
    %c0_i32_17 = arith.constant 0 : i32
    %30 = arith.cmpi ne, %arg1, %c0_i32_17 : i32
    %31 = arith.extui %30 : i1 to i32
    %c0_i32_18 = arith.constant 0 : i32
    %32 = arith.cmpi ne, %31, %c0_i32_18 : i32
    scf.if %32 {
      %c0_19 = arith.constant 0 : index
      %c0_20 = arith.constant 0 : index
      %33 = vector.load %arg7[%c0_19, %c0_20] : memref<16x128xf32, #tpu.memory_space<vmem>>, vector<16x128xf32>
      %34 = arith.addf %33, %26 : vector<16x128xf32>
      %c0_21 = arith.constant 0 : index
      %c0_22 = arith.constant 0 : index
      %35 = vector.load %arg7[%c0_21, %c0_22] : memref<16x128xf32, #tpu.memory_space<vmem>>, vector<16x128xf32>
      tpu.vector_store %arg7[%c0_21, %c0_22], %34 {strides = array<i32>} : memref<16x128xf32, #tpu.memory_space<vmem>>, vector<16x128xf32>,
    } else {
    }
    return
  }
  func.func @transform_0(%arg0: i32, %arg1: i32) -> (i32, i32) {
    %c0_i32 = arith.constant 0 : i32
    %c0_i32_0 = arith.constant 0 : i32
    return %arg0, %c0_i32 : i32, i32
  }
  func.func @transform_1(%arg0: i32, %arg1: i32) -> (i32, i32) {
    %c0_i32 = arith.constant 0 : i32
    %c0_i32_0 = arith.constant 0 : i32
    return %c0_i32, %arg1 : i32, i32
  }
  func.func @transform_2(%arg0: i32, %arg1: i32) -> (i32, i32) {
    %c0_i32 = arith.constant 0 : i32
    %c0_i32_0 = arith.constant 0 : i32
    return %c0_i32, %arg1 : i32, i32
  }
  func.func @transform_3(%arg0: i32, %arg1: i32) -> (i32, i32) {
    %c0_i32 = arith.constant 0 : i32
    %c0_i32_0 = arith.constant 0 : i32
    %c0_i32_1 = arith.constant 0 : i32
    return %c0_i32, %c0_i32_0 : i32, i32
  }
  func.func @transform_4(%arg0: i32, %arg1: i32) -> (i32, i32) {
    %c0_i32 = arith.constant 0 : i32
    %c0_i32_0 = arith.constant 0 : i32
    return %arg1, %c0_i32 : i32, i32
  }
  func.func @transform_5(%arg0: i32, %arg1: i32) -> (i32, i32) {
    %c0_i32 = arith.constant 0 : i32
    %c0_i32_0 = arith.constant 0 : i32
    return %arg0, %c0_i32 : i32, i32
  }
}

</mosaic_0001>

<llo_original>
// kernel: tpu_custom_call.1
$region0: #{tpu_custom_call.1}
  #allocation0 [shape = 'u32[]', space=smem, size = 0x4, offset = 0x4, fixed_abs, tag = 'smem constant byte address 0x4 - core index']
  #allocation1 [shape = 'u32[72,128]{1,0:T(1,128)}', space=vmem, size = 0x9000, scoped, tag = 'internal scratch']
  %s0 = inlined_call_operand.hbm [shape: f32[16,32], index: 0, kind: input, shape index: {}]
  %s1 = inlined_call_operand.hbm [shape: f32[32,128], index: 1, kind: input, shape index: {}]
  %s2 = inlined_call_operand.vmem [shape: f32[1,128], index: 2, kind: input, shape index: {}]
  %s3 = inlined_call_operand.hbm [shape: f32[256,128], index: 3, kind: input, shape index: {}]
  %s4 = inlined_call_operand.hbm [shape: f32[128,128], index: 4, kind: input, shape index: {}]
  %s5 = inlined_call_operand.hbm [shape: f32[16,128], index: 5, kind: output, shape index: {}]
  %s6 = sld [smem:[#allocation0]]
  $region54: #{tpu_custom_call.1} parent=0
    _
  %s8 = ssub.s32 1, %s6
  %s9 = scalar_select 0, %s8, %s6
  $region1: #{tpu_custom_call.1} parent=0
    #allocation2 [shape = 'u8[8192]{0}', space=vmem, size = 0x2000, scoped, tag = 'input window, operand 0, single buffered']
    #allocation3 [shape = 's32[1]{0}', space=sflag, size = 0x4, scoped, tag = 'scoped memory for tpu_custom_call.1']
    #allocation4 [shape = 's32[1]{0}', space=sflag, size = 0x4, scoped, tag = 'scoped memory for tpu_custom_call.1']
    #allocation5 [shape = 'u8[16384]{0}', space=vmem, size = 0x4000, scoped, tag = 'input window, operand 1, single buffered']
    #allocation6 [shape = 's32[1]{0}', space=sflag, size = 0x4, scoped, tag = 'scoped memory for tpu_custom_call.1']
    #allocation7 [shape = 'u8[131072]{0}', space=vmem, size = 0x20000, scoped, tag = 'input window, operand 3, single buffered']
    #allocation8 [shape = 'u8[65536]{0}', space=vmem, size = 0x10000, scoped, tag = 'input window, operand 4, single buffered']
    #allocation9 [shape = 's32[1]{0}', space=sflag, size = 0x4, scoped, tag = 'scoped memory for tpu_custom_call.1']
    #allocation10 [shape = 'u8[8192]{0}', space=vmem, size = 0x2000, scoped, tag = 'output window, operand 0, single buffered']
    %10 = vsyncpa [#allocation3], 0
    %11 = vsyncpa [#allocation6], 0
    %12 = vsyncpa [#allocation9], 0
    %13 = vsyncpa [#allocation4], 0
    // Predicated region
    $region2: #{tpu_custom_call.1} parent=1 // pred_check
      _
    $region3: #{tpu_custom_call.1} parent=1 // pred_check_branch
      %15 = sbr.rel (0) target = $region5
    $region4: #{tpu_custom_call.1} parent=1 // pred_region
      %17 = vsyncadd [#allocation3], 0
      %s18 = sshll.u32 %s0, 4
      %s19 = int_to_ptr.hbm [resolvable:$true] %s18
      %s20 = sshll.u32 [#allocation2], 4
      %s21 = int_to_ptr.vmem [resolvable:$true] %s20
      %26 = dma.hbm_to_vmem [thread:$0]  %s19, 256, %s21, [#allocation3], 128, 128, 8
    $region5: #{tpu_custom_call.1} parent=1 // pred_fallthru
      _
    // Predicated region
    $region6: #{tpu_custom_call.1} parent=1 // pred_check
      _
    $region7: #{tpu_custom_call.1} parent=1 // pred_check_branch
      %28 = sbr.rel (0) target = $region9
    $region8: #{tpu_custom_call.1} parent=1 // pred_region
      %30 = vsyncadd [#allocation6], 0
      %s31 = sshll.u32 %s1, 4
      %s32 = int_to_ptr.hbm [resolvable:$true] %s31
      %s33 = sshll.u32 [#allocation5], 4
      %s34 = int_to_ptr.vmem [resolvable:$true] %s33
      %39 = dma.hbm_to_vmem [thread:$0]  %s32, 512, %s34, [#allocation6], 128, 128, 8
    $region9: #{tpu_custom_call.1} parent=1 // pred_fallthru
      _
    // Predicated region
    $region10: #{tpu_custom_call.1} parent=1 // pred_check
      _
    $region11: #{tpu_custom_call.1} parent=1 // pred_check_branch
      %41 = sbr.rel (0) target = $region13
    $region12: #{tpu_custom_call.1} parent=1 // pred_region
      _
    $region13: #{tpu_custom_call.1} parent=1 // pred_fallthru
      _
    // Predicated region
    $region14: #{tpu_custom_call.1} parent=1 // pred_check
      _
    $region15: #{tpu_custom_call.1} parent=1 // pred_check_branch
      %43 = sbr.rel (0) target = $region17
    $region16: #{tpu_custom_call.1} parent=1 // pred_region
      %45 = vsyncadd [#allocation6], 0
      %s46 = sshll.u32 %s3, 4
      %s47 = int_to_ptr.hbm [resolvable:$true] %s46
      %s48 = sshll.u32 [#allocation7], 4
      %s49 = int_to_ptr.vmem [resolvable:$true] %s48
      %54 = dma.hbm_to_vmem [thread:$0]  %s47, 4096, %s49, [#allocation6], 128, 128, 8
    $region17: #{tpu_custom_call.1} parent=1 // pred_fallthru
      _
    // Predicated region
    $region18: #{tpu_custom_call.1} parent=1 // pred_check
      _
    $region19: #{tpu_custom_call.1} parent=1 // pred_check_branch
      %56 = sbr.rel (0) target = $region21
    $region20: #{tpu_custom_call.1} parent=1 // pred_region
      %58 = vsyncadd [#allocation9], 0
      %s59 = sshll.u32 %s4, 4
      %s60 = int_to_ptr.hbm [resolvable:$true] %s59
      %s61 = sshll.u32 [#allocation8], 4
      %s62 = int_to_ptr.vmem [resolvable:$true] %s61
      %67 = dma.hbm_to_vmem [thread:$0]  %s60, 2048, %s62, [#allocation9], 128, 128, 8
    $region21: #{tpu_custom_call.1} parent=1 // pred_fallthru
      _
    // Predicated region
    $region22: #{tpu_custom_call.1} parent=1 // pred_check
      _
    $region23: #{tpu_custom_call.1} parent=1 // pred_check_branch
      %69 = sbr.rel (0) target = $region25
    $region24: #{tpu_custom_call.1} parent=1 // pred_region
      %71 = dma.done [#allocation3], 256
    $region25: #{tpu_custom_call.1} parent=1 // pred_fallthru
      _
    // Predicated region
    $region26: #{tpu_custom_call.1} parent=1 // pred_check
      _
    $region27: #{tpu_custom_call.1} parent=1 // pred_check_branch
      %73 = sbr.rel (0) target = $region29
    $region28: #{tpu_custom_call.1} parent=1 // pred_region
      %75 = dma.done [#allocation6], 512
    $region29: #{tpu_custom_call.1} parent=1 // pred_fallthru
      _
    // Predicated region
    $region30: #{tpu_custom_call.1} parent=1 // pred_check
      _
    $region31: #{tpu_custom_call.1} parent=1 // pred_check_branch
      %77 = sbr.rel (0) target = $region33
    $region32: #{tpu_custom_call.1} parent=1 // pred_region
      %79 = dma.done [#allocation6], 4096
    $region33: #{tpu_custom_call.1} parent=1 // pred_fallthru
      _
    // Predicated region
    $region34: #{tpu_custom_call.1} parent=1 // pred_check
      _
    $region35: #{tpu_custom_call.1} parent=1 // pred_check_branch
      %81 = sbr.rel (0) target = $region37
    $region36: #{tpu_custom_call.1} parent=1 // pred_region
      %83 = dma.done [#allocation9], 2048
    $region37: #{tpu_custom_call.1} parent=1 // pred_fallthru
      _
    %v84 = vld [vmem:[#allocation2] sm:$0xff]
    %v85 = vld [vmem:[#allocation2 + $0x8] sm:$0xff]
    %v86 = vld [vmem:[#allocation5] sm:$0xff]
    %v87 = vld [vmem:[#allocation5 + $0x8] sm:$0xff]
    %v88 = vld [vmem:[#allocation5 + $0x10] sm:$0xff]
    %v89 = vld [vmem:[#allocation5 + $0x18] sm:$0xff]
    %v90 = vld [vmem:[%s2] sm:$0x1]
    %v92 = vperm.slane %v90, 0
    %vm94 = vcmask 261120
    %v96 = vsel %vm94, %v84, 0
    %v99 = vsel %vm94, %v85, 0
    %101 = vmatpush.msra.mxu0 0.0
    %102 = vmatpush.msra.mxu0 0.0
    %103 = vmatpush.msra.mxu0 0.0
    %104 = vmatpush.msra.mxu0 0.0
    %105 = vmatpush.msra.mxu0 0.0
    %106 = vmatpush.msra.mxu0 0.0
    %107 = vmatpush.msra.mxu0 0.0
    %108 = vmatpush.msra.mxu0 0.0
    %109 = vmatpush.msra.mxu0 0.0
    %110 = vmatpush.msra.mxu0 0.0
    %111 = vmatpush.msra.mxu0 0.0
    %112 = vmatpush.msra.mxu0 0.0
    %113 = vmatpush.msra.mxu0 %v89
    %114 = vmatpush.msra.mxu0 %v88
    %115 = vmatpush.msra.mxu0 %v87
    %116 = vmatpush.msra.mxu0 %v86
    %117 = vmatmul.f32.gmra.mxu0 %v96
    %v118 = vpop.f32.mrf.mxu0
    %v119 = vadd.f32 %v92, %v118
    %120 = vmatmul.f32.gmra.mxu0 %v99
    %v121 = vpop.f32.mrf.mxu0
    %v122 = vadd.f32 %v92, %v121
    %123 = vdwg.mxu0
    %v124 = vand.u32 2147483647, %v119
    %v125 = vand.u32 2147483647, %v122
    %v126 = vsub.f32 0.0, %v124
    %v127 = vsub.f32 0.0, %v125
    %v128 = vmul.f32 %v126, 1.442695
    %v129 = vpow.pop %v128
    %v130 = vmul.f32 %v127, 1.442695
    %v131 = vpow.pop %v130
    %v132 = vadd.f32 %v129, 1.0
    %v133 = vadd.f32 %v131, 1.0
    %v134 = vlog2.pop %v132
    %v135 = vmul.f32 %v134, 0.6931472
    %v136 = vlog2.pop %v133
    %v137 = vmul.f32 %v136, 0.6931472
    %v138 = vsub.f32 0.0, %v119
    %v139 = vsub.f32 0.0, %v122
    %v140 = vmax.f32 %v138, 0.0
    %v141 = vmax.f32 %v139, 0.0
    %v142 = vadd.f32 %v140, %v135
    %v143 = vadd.f32 %v141, %v137
    %v144 = vadd.f32 %v119, %v142
    %v145 = vadd.f32 %v122, %v143
    %v146 = vld [vmem:[#allocation7] sm:$0xff]
    %v147 = vld [vmem:[#allocation7 + $0x8] sm:$0xff]
    %v148 = vld [vmem:[#allocation7 + $0x10] sm:$0xff]
    %v149 = vld [vmem:[#allocation7 + $0x18] sm:$0xff]
    %v150 = vld [vmem:[#allocation7 + $0x20] sm:$0xff]
    %v151 = vld [vmem:[#allocation7 + $0x28] sm:$0xff]
    %v152 = vld [vmem:[#allocation7 + $0x30] sm:$0xff]
    %v153 = vld [vmem:[#allocation7 + $0x38] sm:$0xff]
    %v154 = vld [vmem:[#allocation7 + $0x40] sm:$0xff]
    %v155 = vld [vmem:[#allocation7 + $0x48] sm:$0xff]
    %v156 = vld [vmem:[#allocation7 + $0x50] sm:$0xff]
    %v157 = vld [vmem:[#allocation7 + $0x58] sm:$0xff]
    %v158 = vld [vmem:[#allocation7 + $0x60] sm:$0xff]
    %v159 = vld [vmem:[#allocation7 + $0x68] sm:$0xff]
    %v160 = vld [vmem:[#allocation7 + $0x70] sm:$0xff]
    %v161 = vld [vmem:[#allocation7 + $0x78] sm:$0xff]
    %v162 = vld [vmem:[#allocation7 + $0x80] sm:$0xff]
    %v163 = vld [vmem:[#allocation7 + $0x88] sm:$0xff]
    %v164 = vld [vmem:[#allocation7 + $0x90] sm:$0xff]
    %v165 = vld [vmem:[#allocation7 + $0x98] sm:$0xff]
    %v166 = vld [vmem:[#allocation7 + $0xa0] sm:$0xff]
    %v167 = vld [vmem:[#allocation7 + $0xa8] sm:$0xff]
    %v168 = vld [vmem:[#allocation7 + $0xb0] sm:$0xff]
    %v169 = vld [vmem:[#allocation7 + $0xb8] sm:$0xff]
    %v170 = vld [vmem:[#allocation7 + $0xc0] sm:$0xff]
    %v171 = vld [vmem:[#allocation7 + $0xc8] sm:$0xff]
    %v172 = vld [vmem:[#allocation7 + $0xd0] sm:$0xff]
    %v173 = vld [vmem:[#allocation7 + $0xd8] sm:$0xff]
    %v174 = vld [vmem:[#allocation7 + $0xe0] sm:$0xff]
    %v175 = vld [vmem:[#allocation7 + $0xe8] sm:$0xff]
    %v176 = vld [vmem:[#allocation7 + $0xf0] sm:$0xff]
    %v177 = vld [vmem:[#allocation7 + $0xf8] sm:$0xff]
    %178 = vmatpush.msra.mxu0 %v161
    %179 = vmatpush.msra.mxu0 %v160
    %180 = vmatpush.msra.mxu0 %v159
    %181 = vmatpush.msra.mxu0 %v158
    %182 = vmatpush.msra.mxu0 %v157
    %183 = vmatpush.msra.mxu0 %v156
    %184 = vmatpush.msra.mxu0 %v155
    %185 = vmatpush.msra.mxu0 %v154
    %186 = vmatpush.msra.mxu0 %v153
    %187 = vmatpush.msra.mxu0 %v152
    %188 = vmatpush.msra.mxu0 %v151
    %189 = vmatpush.msra.mxu0 %v150
    %190 = vmatpush.msra.mxu0 %v149
    %191 = vmatpush.msra.mxu0 %v148
    %192 = vmatpush.msra.mxu0 %v147
    %193 = vmatpush.msra.mxu0 %v146
    %194 = vmatmul.f32.gmra.mxu0 %v142
    %v195 = vpop.f32.mrf.mxu0
    %v196 = vadd.f32 0.0, %v195
    %197 = vmatmul.f32.gmra.mxu0 %v143
    %v198 = vpop.f32.mrf.mxu0
    %v199 = vadd.f32 0.0, %v198
    %200 = vdwg.mxu0
    %201 = vmatpush.msra.mxu0 %v177
    %202 = vmatpush.msra.mxu0 %v176
    %203 = vmatpush.msra.mxu0 %v175
    %204 = vmatpush.msra.mxu0 %v174
    %205 = vmatpush.msra.mxu0 %v173
    %206 = vmatpush.msra.mxu0 %v172
    %207 = vmatpush.msra.mxu0 %v171
    %208 = vmatpush.msra.mxu0 %v170
    %209 = vmatpush.msra.mxu0 %v169
    %210 = vmatpush.msra.mxu0 %v168
    %211 = vmatpush.msra.mxu0 %v167
    %212 = vmatpush.msra.mxu0 %v166
    %213 = vmatpush.msra.mxu0 %v165
    %214 = vmatpush.msra.mxu0 %v164
    %215 = vmatpush.msra.mxu0 %v163
    %216 = vmatpush.msra.mxu0 %v162
    %217 = vmatmul.f32.gmra.mxu0 %v144
    %v218 = vpop.f32.mrf.mxu0
    %v219 = vadd.f32 %v196, %v218
    %220 = vmatmul.f32.gmra.mxu0 %v145
    %v221 = vpop.f32.mrf.mxu0
    %v222 = vadd.f32 %v199, %v221
    %223 = vdwg.mxu0
    %v224 = vsub.f32 0.0, %v219
    %v225 = vsub.f32 0.0, %v222
    %v226 = vmul.f32 %v224, 1.442695
    %v227 = vpow.pop %v226
    %v228 = vmul.f32 %v225, 1.442695
    %v229 = vpow.pop %v228
    %v230 = vld [vmem:[#allocation8] sm:$0xff]
    %v231 = vld [vmem:[#allocation8 + $0x8] sm:$0xff]
    %v232 = vld [vmem:[#allocation8 + $0x10] sm:$0xff]
    %v233 = vld [vmem:[#allocation8 + $0x18] sm:$0xff]
    %v234 = vld [vmem:[#allocation8 + $0x20] sm:$0xff]
    %v235 = vld [vmem:[#allocation8 + $0x28] sm:$0xff]
    %v236 = vld [vmem:[#allocation8 + $0x30] sm:$0xff]
    %v237 = vld [vmem:[#allocation8 + $0x38] sm:$0xff]
    %v238 = vld [vmem:[#allocation8 + $0x40] sm:$0xff]
    %v239 = vld [vmem:[#allocation8 + $0x48] sm:$0xff]
    %v240 = vld [vmem:[#allocation8 + $0x50] sm:$0xff]
    %v241 = vld [vmem:[#allocation8 + $0x58] sm:$0xff]
    %v242 = vld [vmem:[#allocation8 + $0x60] sm:$0xff]
    %v243 = vld [vmem:[#allocation8 + $0x68] sm:$0xff]
    %v244 = vld [vmem:[#allocation8 + $0x70] sm:$0xff]
    %v245 = vld [vmem:[#allocation8 + $0x78] sm:$0xff]
    %246 = vmatpush.msra.mxu0 %v245
    %247 = vmatpush.msra.mxu0 %v244
    %248 = vmatpush.msra.mxu0 %v243
    %249 = vmatpush.msra.mxu0 %v242
    %250 = vmatpush.msra.mxu0 %v241
    %251 = vmatpush.msra.mxu0 %v240
    %252 = vmatpush.msra.mxu0 %v239
    %253 = vmatpush.msra.mxu0 %v238
    %254 = vmatpush.msra.mxu0 %v237
    %255 = vmatpush.msra.mxu0 %v236
    %256 = vmatpush.msra.mxu0 %v235
    %257 = vmatpush.msra.mxu0 %v234
    %258 = vmatpush.msra.mxu0 %v233
    %259 = vmatpush.msra.mxu0 %v232
    %260 = vmatpush.msra.mxu0 %v231
    %261 = vmatpush.msra.mxu0 %v230
    %262 = vmatmul.f32.gmra.mxu0 %v227
    %v263 = vpop.f32.mrf.mxu0
    %v264 = vadd.f32 0.0, %v263
    %265 = vmatmul.f32.gmra.mxu0 %v229
    %v266 = vpop.f32.mrf.mxu0
    %v267 = vadd.f32 0.0, %v266
    %268 = vdwg.mxu0
    %p269 = scmp.eq.s32.totalorder 0, 0
    // Predicated region
    $region38: #{tpu_custom_call.1} parent=1 // pred_check
      %p270 = pneg %p269
    $region39: #{tpu_custom_call.1} parent=1 // pred_check_branch
      %272 = sbr.rel (%p270) target = $region41
    $region40: #{tpu_custom_call.1} parent=1 // pred_region
      %273 = vst [vmem:[#allocation10] sm:$0xff] %v264
      %274 = vst [vmem:[#allocation10 + $0x8] sm:$0xff] %v267
    $region41: #{tpu_custom_call.1} parent=1 // pred_fallthru
      _
    %p275 = scmp.ne.s32.totalorder 0, 0
    // Predicated region
    $region42: #{tpu_custom_call.1} parent=1 // pred_check
      %p276 = pneg %p275
    $region43: #{tpu_custom_call.1} parent=1 // pred_check_branch
      %278 = sbr.rel (%p276) target = $region45
    $region44: #{tpu_custom_call.1} parent=1 // pred_region
      %v279 = vld [vmem:[#allocation10] sm:$0xff]
      %v280 = vld [vmem:[#allocation10 + $0x8] sm:$0xff]
      %v281 = vadd.f32 %v279, %v264
      %v282 = vadd.f32 %v280, %v267
      %283 = vst [vmem:[#allocation10] sm:$0xff] %v281
      %284 = vst [vmem:[#allocation10 + $0x8] sm:$0xff] %v282
    $region45: #{tpu_custom_call.1} parent=1 // pred_fallthru
      _
    // Predicated region
    $region46: #{tpu_custom_call.1} parent=1 // pred_check
      _
    $region47: #{tpu_custom_call.1} parent=1 // pred_check_branch
      %286 = sbr.rel (0) target = $region49
    $region48: #{tpu_custom_call.1} parent=1 // pred_region
      %288 = vsyncadd [#allocation4], 0
      %s289 = sshll.u32 [#allocation10], 4
      %s290 = int_to_ptr.vmem [resolvable:$true] %s289
      %s291 = sshll.u32 %s5, 4
      %s292 = int_to_ptr.hbm [resolvable:$true] %s291
      %297 = dma.vmem_to_hbm [thread:$0]  %s290, 256, %s292, [#allocation4], 128, 128, 8
    $region49: #{tpu_custom_call.1} parent=1 // pred_fallthru
      _
    // Predicated region
    $region50: #{tpu_custom_call.1} parent=1 // pred_check
      _
    $region51: #{tpu_custom_call.1} parent=1 // pred_check_branch
      %299 = sbr.rel (0) target = $region53
    $region52: #{tpu_custom_call.1} parent=1 // pred_region
      %301 = dma.done [#allocation4], 256
    $region53: #{tpu_custom_call.1} parent=1 // pred_fallthru
      _
    %302 = vsyncpa [#allocation3], 1
    %303 = vsyncpa [#allocation6], 1
    %304 = vsyncpa [#allocation9], 1
    %305 = vsyncpa [#allocation4], 1

</llo_original>
